<compile_context>
chip_gen: v7x
topology: tpu7x:2x2x1
jax: 0.10.0
libtpu: 0.0.40
codegen_flags: <defaults>
</compile_context>

<pallas_src>
import functools
import math

import jax
import jax.numpy as jnp
from jax.experimental import pallas as pl
from jax.experimental.pallas import tpu as pltpu


def _round_up(n: int, m: int) -> int:
    return ((n + m - 1) // m) * m


def intent_slot_attention_kernel(p_ref, x_ref, wq_ref, bq_ref, wk_ref, bk_ref,
                                 wv_ref, bv_ref, wgo_ref, wgp_ref, bg_ref,
                                 o_ref, *, inv_sqrt_h):
    p = p_ref[0]                     # (tm, H), input dtype
    xb = x_ref[0]                    # (C,  H), input dtype
    pf = p.astype(jnp.float32)       # f32 copy for residual / gate arithmetic

    # Projections on the MXU with f32 accumulation (no weight casts in-kernel).
    q = jnp.dot(p, wq_ref[...], preferred_element_type=jnp.float32) + bq_ref[...]
    k = jnp.dot(xb, wk_ref[...], preferred_element_type=jnp.float32) + bk_ref[...]
    v = jnp.dot(xb, wv_ref[...], preferred_element_type=jnp.float32) + bv_ref[...]

    # scores = q @ k^T  -> (tm, C); contract on hidden dim, no explicit transpose.
    s = jax.lax.dot_general(q, k, (((1,), (1,)), ((), ())),
                            preferred_element_type=jnp.float32)

    # softmax over intents, then the module's post-softmax 1/sqrt(H) scaling.
    m = jnp.max(s, axis=-1, keepdims=True)
    e = jnp.exp(s - m)
    denom = jnp.sum(e, axis=-1, keepdims=True)
    probs = e * (pl.reciprocal(denom) * inv_sqrt_h)

    # attention output + residual
    out = jnp.dot(probs, v, preferred_element_type=jnp.float32) + pf

    # gate: sigmoid([out, p] @ Wg + bg) as two split mat-vecs (avoids concat)
    g_logit = (jnp.dot(out, wgo_ref[...], preferred_element_type=jnp.float32)
               + jnp.dot(pf, wgp_ref[...], preferred_element_type=jnp.float32)
               + bg_ref[...])
    g = pl.reciprocal(1.0 + jnp.exp(-g_logit))          # sigmoid

    o_ref[0] = (g * out + (1.0 - g) * pf).astype(o_ref.dtype)


@functools.partial(jax.jit, static_argnames=("tm",))
def intent_slot_attention_forward(p, x, wq, bq, wk, bk, wv, bv,
                                  wg_out, wg_p, bg, *, tm=128):
    """p: (B, S, H) slot/sequence states; x: (B, C, H) intent states."""
    B, S, H = p.shape
    _, C, _ = x.shape

    # Row tile: as large as possible (MXU-friendly), multiple of 8, clamped to S.
    tm_eff = min(tm, _round_up(S, 8))
    S_pad = _round_up(S, tm_eff)
    p_in = jnp.pad(p, ((0, 0), (0, S_pad - S), (0, 0))) if S_pad != S else p

    grid = (B, S_pad // tm_eff)
    kernel = functools.partial(intent_slot_attention_kernel,
                               inv_sqrt_h=1.0 / math.sqrt(H))

    out = pl.pallas_call(
        kernel,
        out_shape=jax.ShapeDtypeStruct((B, S_pad, H), p.dtype),
        grid_spec=pltpu.PrefetchScalarGridSpec(
            num_scalar_prefetch=0,
            grid=grid,
            in_specs=[
                pl.BlockSpec((1, tm_eff, H), lambda b, i: (b, i, 0)),  # p tile
                pl.BlockSpec((1, C, H), lambda b, i: (b, 0, 0)),       # x (intents)
                pl.BlockSpec((H, H), lambda b, i: (0, 0)),             # Wq (resident)
                pl.BlockSpec((1, H), lambda b, i: (0, 0)),             # bq
                pl.BlockSpec((H, H), lambda b, i: (0, 0)),             # Wk
                pl.BlockSpec((1, H), lambda b, i: (0, 0)),             # bk
                pl.BlockSpec((H, H), lambda b, i: (0, 0)),             # Wv
                pl.BlockSpec((1, H), lambda b, i: (0, 0)),             # bv
                pl.BlockSpec((H, 1), lambda b, i: (0, 0)),             # Wg (out half)
                pl.BlockSpec((H, 1), lambda b, i: (0, 0)),             # Wg (p half)
                pl.BlockSpec((1, 1), lambda b, i: (0, 0)),             # bg
            ],
            out_specs=pl.BlockSpec((1, tm_eff, H), lambda b, i: (b, i, 0)),
        ),
        compiler_params=pltpu.CompilerParams(
            dimension_semantics=("parallel", "parallel")),
    )(p_in, x, wq, bq, wk, bk, wv, bv, wg_out, wg_p, bg)

    return out[:, :S, :]


def init_params(key, hidden_size):
    """Shapes mirror nn.Linear, stored pre-transposed to (in, out)."""
    ks = jax.random.split(key, 8)

    def linear(kw, kb, fan_in, fan_out):
        lim = 1.0 / math.sqrt(fan_in)
        w = jax.random.uniform(kw, (fan_in, fan_out), jnp.float32, -lim, lim)
        b = jax.random.uniform(kb, (1, fan_out), jnp.float32, -lim, lim)
        return w, b

    H = hidden_size
    wq, bq = linear(ks[0], ks[1], H, H)
    wk, bk = linear(ks[2], ks[3], H, H)
    wv, bv = linear(ks[4], ks[5], H, H)
    wg_full, bg = linear(ks[6], ks[7], 2 * H, 1)   # gate: Linear(2H, 1)
    wg_out = wg_full[:H]                            # multiplies `out`
    wg_p = wg_full[H:]                              # multiplies `p`
    bg = bg.reshape(1, 1)
    return wq, bq, wk, bk, wv, bv, wg_out, wg_p, bg


def reference_forward(p, x, wq, bq, wk, bk, wv, bv, wg_out, wg_p, bg):
    H = p.shape[-1]
    q = p @ wq + bq
    k = x @ wk + bk
    v = x @ wv + bv
    scores = jax.nn.softmax(q @ jnp.swapaxes(k, -1, -2), axis=-1) / math.sqrt(H)
    out = jnp.einsum('bcl,bld->bcd', scores, v) + p
    g = jax.nn.sigmoid(out @ wg_out + p @ wg_p + bg)
    return g * out + (1.0 - g) * p


if __name__ == "__main__":
    # TODO(synk): the PyTorch module takes an (unused) `mask` arg and an unused
    # `self.score` layer; both are omitted here since forward() never uses them.
    batch, seq, num_intents, hidden = 2, 8, 4, 32
    key = jax.random.PRNGKey(0)
    kp, kx, kw = jax.random.split(key, 3)
    p = jax.random.normal(kp, (batch, seq, hidden), jnp.float32)
    x = jax.random.normal(kx, (batch, num_intents, hidden), jnp.float32)
    params = init_params(kw, hidden)

    out = intent_slot_attention_forward(p, x, *params)
    out = jax.block_until_ready(out)

    ref = reference_forward(p, x, *params)
    assert out.shape == (batch, seq, hidden)
    assert jnp.allclose(out, ref, atol=1e-4, rtol=1e-4), "mismatch vs reference"
    print("KERNEL_OK")
</pallas_src>

<mosaic_0001>
module attributes {stable_mosaic.version = 11 : i64} {
  func.func @intent_slot_attention_kernel(%arg0: i32, %arg1: i32, %arg2: memref<1x8x32xf32, #tpu.memory_space<vmem>>, %arg3: memref<1x4x32xf32, #tpu.memory_space<vmem>>, %arg4: memref<32x32xf32, #tpu.memory_space<vmem>>, %arg5: memref<1x32xf32, #tpu.memory_space<vmem>>, %arg6: memref<32x32xf32, #tpu.memory_space<vmem>>, %arg7: memref<1x32xf32, #tpu.memory_space<vmem>>, %arg8: memref<32x32xf32, #tpu.memory_space<vmem>>, %arg9: memref<1x32xf32, #tpu.memory_space<vmem>>, %arg10: memref<32x1xf32, #tpu.memory_space<vmem>>, %arg11: memref<32x1xf32, #tpu.memory_space<vmem>>, %arg12: memref<1x1xf32, #tpu.memory_space<vmem>>, %arg13: memref<1x8x32xf32, #tpu.memory_space<vmem>>) attributes {dimension_semantics = [#tpu.dimension_semantics<parallel>, #tpu.dimension_semantics<parallel>], iteration_bounds = array<i64: 2, 1>, scalar_prefetch = 0 : i64, scratch_operands = 0 : i64, tpu.core_type = #tpu.core_type<tc>, window_params = [{transform_indices = @transform_0, window_bounds = array<i64: 1, 8, 32>}, {transform_indices = @transform_1, window_bounds = array<i64: 1, 4, 32>}, {pipeline_mode = #tpu.pipeline_mode<synchronous>, transform_indices = @transform_2, window_bounds = array<i64: 32, 32>}, {pipeline_mode = #tpu.pipeline_mode<synchronous>, transform_indices = @transform_3, window_bounds = array<i64: 1, 32>}, {pipeline_mode = #tpu.pipeline_mode<synchronous>, transform_indices = @transform_4, window_bounds = array<i64: 32, 32>}, {pipeline_mode = #tpu.pipeline_mode<synchronous>, transform_indices = @transform_5, window_bounds = array<i64: 1, 32>}, {pipeline_mode = #tpu.pipeline_mode<synchronous>, transform_indices = @transform_6, window_bounds = array<i64: 32, 32>}, {pipeline_mode = #tpu.pipeline_mode<synchronous>, transform_indices = @transform_7, window_bounds = array<i64: 1, 32>}, {pipeline_mode = #tpu.pipeline_mode<synchronous>, transform_indices = @transform_8, window_bounds = array<i64: 32, 1>}, {pipeline_mode = #tpu.pipeline_mode<synchronous>, transform_indices = @transform_9, window_bounds = array<i64: 32, 1>}, {pipeline_mode = #tpu.pipeline_mode<synchronous>, transform_indices = @transform_10, window_bounds = array<i64: 1, 1>}, {transform_indices = @transform_11, window_bounds = array<i64: 1, 8, 32>}]} {
    %c0 = arith.constant 0 : index
    %c0_0 = arith.constant 0 : index
    %c0_1 = arith.constant 0 : index
    %0 = vector.load %arg2[%c0, %c0_0, %c0_1] : memref<1x8x32xf32, #tpu.memory_space<vmem>>, vector<1x8x32xf32>
    %1 = vector.shape_cast %0 : vector<1x8x32xf32> to vector<8x32xf32>
    %c0_2 = arith.constant 0 : index
    %c0_3 = arith.constant 0 : index
    %c0_4 = arith.constant 0 : index
    %2 = vector.load %arg3[%c0_2, %c0_3, %c0_4] : memref<1x4x32xf32, #tpu.memory_space<vmem>>, vector<1x4x32xf32>
    %3 = vector.shape_cast %2 : vector<1x4x32xf32> to vector<4x32xf32>
    %c0_5 = arith.constant 0 : index
    %c0_6 = arith.constant 0 : index
    %4 = vector.load %arg4[%c0_5, %c0_6] : memref<32x32xf32, #tpu.memory_space<vmem>>, vector<32x32xf32>
    %cst = arith.constant dense<0.000000e+00> : vector<8x32xf32>
    %5 = tpu.matmul %1, %4, %cst {dimension_numbers = #tpu.dot_dimension_numbers<[1], [0], [0], [1], [0, 0, 1, 1], [], []>} : vector<8x32xf32>, vector<32x32xf32>, vector<8x32xf32> -> vector<8x32xf32>
    %c0_7 = arith.constant 0 : index
    %c0_8 = arith.constant 0 : index
    %6 = vector.load %arg5[%c0_7, %c0_8] : memref<1x32xf32, #tpu.memory_space<vmem>>, vector<1x32xf32>
    %7 = vector.broadcast %6 : vector<1x32xf32> to vector<8x32xf32>
    %8 = arith.addf %5, %7 : vector<8x32xf32>
    %c0_9 = arith.constant 0 : index
    %c0_10 = arith.constant 0 : index
    %9 = vector.load %arg6[%c0_9, %c0_10] : memref<32x32xf32, #tpu.memory_space<vmem>>, vector<32x32xf32>
    %cst_11 = arith.constant dense<0.000000e+00> : vector<4x32xf32>
    %10 = tpu.matmul %3, %9, %cst_11 {dimension_numbers = #tpu.dot_dimension_numbers<[1], [0], [0], [1], [0, 0, 1, 1], [], []>} : vector<4x32xf32>, vector<32x32xf32>, vector<4x32xf32> -> vector<4x32xf32>
    %c0_12 = arith.constant 0 : index
    %c0_13 = arith.constant 0 : index
    %11 = vector.load %arg7[%c0_12, %c0_13] : memref<1x32xf32, #tpu.memory_space<vmem>>, vector<1x32xf32>
    %12 = vector.broadcast %11 : vector<1x32xf32> to vector<4x32xf32>
    %13 = arith.addf %10, %12 : vector<4x32xf32>
    %c0_14 = arith.constant 0 : index
    %c0_15 = arith.constant 0 : index
    %14 = vector.load %arg8[%c0_14, %c0_15] : memref<32x32xf32, #tpu.memory_space<vmem>>, vector<32x32xf32>
    %cst_16 = arith.constant dense<0.000000e+00> : vector<4x32xf32>
    %15 = tpu.matmul %3, %14, %cst_16 {dimension_numbers = #tpu.dot_dimension_numbers<[1], [0], [0], [1], [0, 0, 1, 1], [], []>} : vector<4x32xf32>, vector<32x32xf32>, vector<4x32xf32> -> vector<4x32xf32>
    %c0_17 = arith.constant 0 : index
    %c0_18 = arith.constant 0 : index
    %16 = vector.load %arg9[%c0_17, %c0_18] : memref<1x32xf32, #tpu.memory_space<vmem>>, vector<1x32xf32>
    %17 = vector.broadcast %16 : vector<1x32xf32> to vector<4x32xf32>
    %18 = arith.addf %15, %17 : vector<4x32xf32>
    %cst_19 = arith.constant dense<0.000000e+00> : vector<8x4xf32>
    %19 = tpu.matmul %8, %13, %cst_19 {dimension_numbers = #tpu.dot_dimension_numbers<[1], [1], [0], [0], [0, 0, 1, 0], [], []>} : vector<8x32xf32>, vector<4x32xf32>, vector<8x4xf32> -> vector<8x4xf32>
    %cst_20 = arith.constant dense<0xFF800000> : vector<8xf32>
    %20 = vector.multi_reduction <maximumf>, %19, %cst_20 [1] : vector<8x4xf32> to vector<8xf32>
    %21 = vector.shape_cast %20 : vector<8xf32> to vector<8x1xf32>
    %22 = vector.broadcast %21 : vector<8x1xf32> to vector<8x4xf32>
    %23 = arith.subf %19, %22 : vector<8x4xf32>
    %24 = math.exp %23 : vector<8x4xf32>
    %cst_21 = arith.constant dense<0.000000e+00> : vector<8xf32>
    %25 = vector.multi_reduction <add>, %24, %cst_21 [1] : vector<8x4xf32> to vector<8xf32>
    %26 = vector.shape_cast %25 : vector<8xf32> to vector<8x1xf32>
    %27 = tpu.reciprocal %26 : vector<8x1xf32> -> vector<8x1xf32>
    %cst_22 = arith.constant 0.176776692 : f32
    %28 = vector.broadcast %cst_22 : f32 to vector<8x1xf32>
    %29 = arith.mulf %27, %28 : vector<8x1xf32>
    %30 = vector.broadcast %29 : vector<8x1xf32> to vector<8x4xf32>
    %31 = arith.mulf %24, %30 : vector<8x4xf32>
    %cst_23 = arith.constant dense<0.000000e+00> : vector<8x32xf32>
    %32 = tpu.matmul %31, %18, %cst_23 {dimension_numbers = #tpu.dot_dimension_numbers<[1], [0], [0], [1], [0, 0, 1, 1], [], []>} : vector<8x4xf32>, vector<4x32xf32>, vector<8x32xf32> -> vector<8x32xf32>
    %33 = arith.addf %32, %1 : vector<8x32xf32>
    %c0_24 = arith.constant 0 : index
    %c0_25 = arith.constant 0 : index
    %34 = vector.load %arg10[%c0_24, %c0_25] : memref<32x1xf32, #tpu.memory_space<vmem>>, vector<32x1xf32>
    %cst_26 = arith.constant dense<0.000000e+00> : vector<8x1xf32>
    %35 = tpu.matmul %33, %34, %cst_26 {dimension_numbers = #tpu.dot_dimension_numbers<[1], [0], [0], [1], [0, 0, 1, 1], [], []>} : vector<8x32xf32>, vector<32x1xf32>, vector<8x1xf32> -> vector<8x1xf32>
    %c0_27 = arith.constant 0 : index
    %c0_28 = arith.constant 0 : index
    %36 = vector.load %arg11[%c0_27, %c0_28] : memref<32x1xf32, #tpu.memory_space<vmem>>, vector<32x1xf32>
    %cst_29 = arith.constant dense<0.000000e+00> : vector<8x1xf32>
    %37 = tpu.matmul %1, %36, %cst_29 {dimension_numbers = #tpu.dot_dimension_numbers<[1], [0], [0], [1], [0, 0, 1, 1], [], []>} : vector<8x32xf32>, vector<32x1xf32>, vector<8x1xf32> -> vector<8x1xf32>
    %38 = arith.addf %35, %37 : vector<8x1xf32>
    %c0_30 = arith.constant 0 : index
    %c0_31 = arith.constant 0 : index
    %39 = vector.load %arg12[%c0_30, %c0_31] : memref<1x1xf32, #tpu.memory_space<vmem>>, vector<1x1xf32>
    %40 = vector.broadcast %39 : vector<1x1xf32> to vector<8x1xf32>
    %41 = arith.addf %38, %40 : vector<8x1xf32>
    %cst_32 = arith.constant 0.000000e+00 : f32
    %42 = vector.broadcast %cst_32 : f32 to vector<8x1xf32>
    %43 = arith.subf %42, %41 : vector<8x1xf32>
    %44 = math.exp %43 : vector<8x1xf32>
    %cst_33 = arith.constant 1.000000e+00 : f32
    %45 = vector.broadcast %cst_33 : f32 to vector<8x1xf32>
    %46 = arith.addf %45, %44 : vector<8x1xf32>
    %47 = tpu.reciprocal %46 : vector<8x1xf32> -> vector<8x1xf32>
    %48 = vector.broadcast %47 : vector<8x1xf32> to vector<8x32xf32>
    %49 = arith.mulf %48, %33 : vector<8x32xf32>
    %cst_34 = arith.constant 1.000000e+00 : f32
    %50 = vector.broadcast %cst_34 : f32 to vector<8x1xf32>
    %51 = arith.subf %50, %47 : vector<8x1xf32>
    %52 = vector.broadcast %51 : vector<8x1xf32> to vector<8x32xf32>
    %53 = arith.mulf %52, %1 : vector<8x32xf32>
    %54 = arith.addf %49, %53 : vector<8x32xf32>
    %c0_35 = arith.constant 0 : index
    %c0_36 = arith.constant 0 : index
    %c0_37 = arith.constant 0 : index
    %55 = vector.load %arg13[%c0_35, %c0_36, %c0_37] : memref<1x8x32xf32, #tpu.memory_space<vmem>>, vector<1x8x32xf32>
    %56 = vector.shape_cast %55 : vector<1x8x32xf32> to vector<8x32xf32>
    %57 = vector.shape_cast %54 : vector<8x32xf32> to vector<1x8x32xf32>
    tpu.vector_store %arg13[%c0_35, %c0_36, %c0_37], %57 {strides = array<i32>} : memref<1x8x32xf32, #tpu.memory_space<vmem>>, vector<1x8x32xf32>,
    return
  }
  func.func @transform_0(%arg0: i32, %arg1: i32) -> (i32, i32, i32) {
    %c0_i32 = arith.constant 0 : i32
    %c0_i32_0 = arith.constant 0 : i32
    return %arg0, %arg1, %c0_i32 : i32, i32, i32
  }
  func.func @transform_1(%arg0: i32, %arg1: i32) -> (i32, i32, i32) {
    %c0_i32 = arith.constant 0 : i32
    %c0_i32_0 = arith.constant 0 : i32
    %c0_i32_1 = arith.constant 0 : i32
    return %arg0, %c0_i32, %c0_i32_0 : i32, i32, i32
  }
  func.func @transform_2(%arg0: i32, %arg1: i32) -> (i32, i32) {
    %c0_i32 = arith.constant 0 : i32
    %c0_i32_0 = arith.constant 0 : i32
    %c0_i32_1 = arith.constant 0 : i32
    return %c0_i32, %c0_i32_0 : i32, i32
  }
  func.func @transform_3(%arg0: i32, %arg1: i32) -> (i32, i32) {
    %c0_i32 = arith.constant 0 : i32
    %c0_i32_0 = arith.constant 0 : i32
    %c0_i32_1 = arith.constant 0 : i32
    return %c0_i32, %c0_i32_0 : i32, i32
  }
  func.func @transform_4(%arg0: i32, %arg1: i32) -> (i32, i32) {
    %c0_i32 = arith.constant 0 : i32
    %c0_i32_0 = arith.constant 0 : i32
    %c0_i32_1 = arith.constant 0 : i32
    return %c0_i32, %c0_i32_0 : i32, i32
  }
  func.func @transform_5(%arg0: i32, %arg1: i32) -> (i32, i32) {
    %c0_i32 = arith.constant 0 : i32
    %c0_i32_0 = arith.constant 0 : i32
    %c0_i32_1 = arith.constant 0 : i32
    return %c0_i32, %c0_i32_0 : i32, i32
  }
  func.func @transform_6(%arg0: i32, %arg1: i32) -> (i32, i32) {
    %c0_i32 = arith.constant 0 : i32
    %c0_i32_0 = arith.constant 0 : i32
    %c0_i32_1 = arith.constant 0 : i32
    return %c0_i32, %c0_i32_0 : i32, i32
  }
  func.func @transform_7(%arg0: i32, %arg1: i32) -> (i32, i32) {
    %c0_i32 = arith.constant 0 : i32
    %c0_i32_0 = arith.constant 0 : i32
    %c0_i32_1 = arith.constant 0 : i32
    return %c0_i32, %c0_i32_0 : i32, i32
  }
  func.func @transform_8(%arg0: i32, %arg1: i32) -> (i32, i32) {
    %c0_i32 = arith.constant 0 : i32
    %c0_i32_0 = arith.constant 0 : i32
    %c0_i32_1 = arith.constant 0 : i32
    return %c0_i32, %c0_i32_0 : i32, i32
  }
  func.func @transform_9(%arg0: i32, %arg1: i32) -> (i32, i32) {
    %c0_i32 = arith.constant 0 : i32
    %c0_i32_0 = arith.constant 0 : i32
    %c0_i32_1 = arith.constant 0 : i32
    return %c0_i32, %c0_i32_0 : i32, i32
  }
  func.func @transform_10(%arg0: i32, %arg1: i32) -> (i32, i32) {
    %c0_i32 = arith.constant 0 : i32
    %c0_i32_0 = arith.constant 0 : i32
    %c0_i32_1 = arith.constant 0 : i32
    return %c0_i32, %c0_i32_0 : i32, i32
  }
  func.func @transform_11(%arg0: i32, %arg1: i32) -> (i32, i32, i32) {
    %c0_i32 = arith.constant 0 : i32
    %c0_i32_0 = arith.constant 0 : i32
    return %arg0, %arg1, %c0_i32 : i32, i32, i32
  }
}

</mosaic_0001>

<llo_original>
// kernel: intent_slot_attention_forward.1
$region0: #{intent_slot_attention_forward.1}
  #allocation0 [shape = 'u32[]', space=smem, size = 0x4, offset = 0x4, fixed_abs, tag = 'smem constant byte address 0x4 - core index']
  #allocation1 [shape = 'u32[144,128]{1,0:T(1,128)}', space=vmem, size = 0x12000, scoped, tag = 'internal scratch']
  #allocation2 [shape = 'f32[1,1]{1,0:T(1,128)S(1)}', space=vmem, size = 0x200, scoped, tag = 'scoped memory for intent_slot_attention_forward.1']
  %s0 = inlined_call_operand.hbm [shape: f32[2,8,32], index: 0, kind: input, shape index: {}]
  %s1 = inlined_call_operand.vmem [shape: f32[2,4,32], index: 1, kind: input, shape index: {}]
  %s2 = inlined_call_operand.vmem [shape: f32[32,32], index: 2, kind: input, shape index: {}]
  %s3 = inlined_call_operand.vmem [shape: f32[1,32], index: 3, kind: input, shape index: {}]
  %s4 = inlined_call_operand.vmem [shape: f32[32,32], index: 4, kind: input, shape index: {}]
  %s5 = inlined_call_operand.vmem [shape: f32[1,32], index: 5, kind: input, shape index: {}]
  %s6 = inlined_call_operand.hbm [shape: f32[32,32], index: 6, kind: input, shape index: {}]
  %s7 = inlined_call_operand.vmem [shape: f32[1,32], index: 7, kind: input, shape index: {}]
  %s8 = inlined_call_operand.vmem [shape: f32[32,1], index: 8, kind: input, shape index: {}]
  %s9 = inlined_call_operand.vmem [shape: f32[32,1], index: 9, kind: input, shape index: {}]
  %s10 = inlined_call_operand.<no memory space> [shape: f32[1,1], index: 10, kind: input, shape index: {}]
  %s11 = inlined_call_operand.hbm [shape: f32[2,8,32], index: 11, kind: output, shape index: {}]
  %s12 = sld [smem:[#allocation0]]
  $region85: #{intent_slot_attention_forward.1} parent=0
    _
  %s14 = ssub.s32 1, %s12
  %s15 = scalar_select 0, %s14, %s12
  %v16 = vstv %s10
  %17 = vst [vmem:[#allocation2] sm:$0x1] %v16
  $region1: #{intent_slot_attention_forward.1} parent=0
    #allocation3 [shape = 'u8[8192]{0}', space=vmem, size = 0x2000, scoped, tag = 'input window, operand 0']
    #allocation4 [shape = 's32[2]{0}', space=sflag, size = 0x8, scoped, tag = 'scoped memory for intent_slot_attention_forward.1']
    #allocation5 [shape = 's32[2]{0}', space=sflag, size = 0x8, scoped, tag = 'scoped memory for intent_slot_attention_forward.1']
    #allocation6 [shape = 'u8[16384]{0}', space=vmem, size = 0x4000, scoped, tag = 'input window, operand 6, single buffered']
    #allocation7 [shape = 's32[1]{0}', space=sflag, size = 0x4, scoped, tag = 'scoped memory for intent_slot_attention_forward.1']
    #allocation8 [shape = 'u8[8192]{0}', space=vmem, size = 0x2000, scoped, tag = 'output window, operand 0']
    %18 = vsyncpa [#allocation4], 0
    %s19 = scalar_lea.sflag [#allocation4], 1
    %20 = vsyncpa %s19, 0
    %21 = vsyncpa [#allocation7], 0
    %22 = vsyncpa [#allocation5], 0
    %s23 = scalar_lea.sflag [#allocation5], 1
    %24 = vsyncpa %s23, 0
    loop: start=0, step=1, limit=4
    $region2: #{intent_slot_attention_forward.1} parent=1 // loop_pre_header
      _
    $region3: #{intent_slot_attention_forward.1} parent=1 // loop_header
      %s26 = sphi 0, %s30
      %p27 = scmp.ge.s32.totalorder %s26, 4
      %s33 = sphi 0, %s45
      %s34 = sphi 0, %s41
      %s35 = sphi 0, %s33
      %s36 = sphi 0, %s34
      %s37 = sphi 0, %s35
      %s38 = sphi 0, %s36
      %s50 = sphi 0, %s52
      %s53 = sphi 0, %s50
      %s54 = sphi 0, %s53
      %s70 = sphi 0, %s54
      %s76 = sphi 0, %s78
      %s79 = sphi 0, %s76
      %s80 = sphi 0, %s79
      %s96 = sphi 0, %s80
      %s100 = sphi 0, %s100
      %s102 = sphi 0, %s100
      %s103 = sphi 0, %s102
      %s117 = sphi 0, %s103
      %s121 = sphi 0, %s121
      %s123 = sphi 0, %s121
      %s124 = sphi 0, %s123
      %s138 = sphi 0, %s124
      %s142 = sphi 0, %s142
      %s144 = sphi 0, %s142
      %s145 = sphi 0, %s144
      %s159 = sphi 0, %s145
      %s163 = sphi 0, %s163
      %s165 = sphi 0, %s163
      %s166 = sphi 0, %s165
      %s180 = sphi 0, %s166
      %s184 = sphi 0, %s184
      %s186 = sphi 0, %s184
      %s187 = sphi 0, %s186
      %s201 = sphi 0, %s187
      %s205 = sphi 0, %s205
      %s207 = sphi 0, %s205
      %s208 = sphi 0, %s207
      %s222 = sphi 0, %s208
      %s226 = sphi 0, %s226
      %s228 = sphi 0, %s226
      %s229 = sphi 0, %s228
      %s243 = sphi 0, %s229
      %s247 = sphi 0, %s247
      %s249 = sphi 0, %s247
      %s250 = sphi 0, %s249
      %s264 = sphi 0, %s250
      %s268 = sphi 0, %s268
      %s270 = sphi 0, %s268
      %s271 = sphi 0, %s270
      %s285 = sphi 0, %s271
      %s293 = sphi 0, %s295
      %s296 = sphi 0, %s293
      %s297 = sphi 0, %s296
      %s313 = sphi 0, %s297
    $region4: #{intent_slot_attention_forward.1} parent=1 // loop_header_branch
      %29 = sbr.rel (%p27) target = $region8
    $region5: #{intent_slot_attention_forward.1} parent=1 // loop_body
      %s31 = ssub.s32 %s26, 1
      %s32 = ssub.s32 %s26, 2
      %s39 = sadd.s32 1, %s34
      %p40 = scmp.ge.s32.totalorder %s39, 1
      %s41 = scalar_select %p40, 0, %s39
      %s42 = sadd.s32 1, %s33
      %s43 = scalar_select %p40, %s42, %s33
      %p44 = scmp.ge.s32.totalorder %s43, 2
      %s45 = scalar_select %p44, 0, %s43
      %s46 = ssub.s32 %s33, %s45
      %s47 = ssub.s32 %s34, %s41
      %s48 = sor.u32 %s46, %s47
      %p49 = scmp.eq.s32.totalorder %s48, 0
      %s51 = sadd.s32 %s50, 1
      %s52 = scalar_select %p49, %s50, %s51
      %p55 = pneg %p49
      %p56 = scmp.eq.s32.totalorder %s26, 1
      %p57 = por %p55, %p56
      %p58 = scmp.ne.s32.totalorder %s50, %s53
      %p59 = scmp.eq.s32.totalorder %s26, 0
      %p60 = por %p58, %p59
      %p61 = scmp.ne.s32.totalorder %s50, %s53
      %p62 = scmp.eq.s32.totalorder %s31, 1
      %p63 = por %p61, %p62
      %p64 = scmp.ne.s32.totalorder %s53, %s54
      %p65 = scmp.eq.s32.totalorder %s31, 0
      %p66 = por %p64, %p65
      %p67 = scmp.ne.s32.totalorder %s53, %s54
      %p68 = scmp.eq.s32.totalorder %s32, 1
      %p69 = por %p67, %p68
      %p71 = scmp.ne.s32.totalorder %s54, %s70
      %p72 = scmp.eq.s32.totalorder %s32, 0
      %p73 = por %p71, %p72
      %s74 = ssub.s32 %s33, %s45
      %p75 = scmp.eq.s32.totalorder %s74, 0
      %s77 = sadd.s32 %s76, 1
      %s78 = scalar_select %p75, %s76, %s77
      %p81 = pneg %p75
      %p82 = scmp.eq.s32.totalorder %s26, 1
      %p83 = por %p81, %p82
      %p84 = scmp.ne.s32.totalorder %s76, %s79
      %p85 = scmp.eq.s32.totalorder %s26, 0
      %p86 = por %p84, %p85
      %p87 = scmp.ne.s32.totalorder %s76, %s79
      %p88 = scmp.eq.s32.totalorder %s31, 1
      %p89 = por %p87, %p88
      %p90 = scmp.ne.s32.totalorder %s79, %s80
      %p91 = scmp.eq.s32.totalorder %s31, 0
      %p92 = por %p90, %p91
      %p93 = scmp.ne.s32.totalorder %s79, %s80
      %p94 = scmp.eq.s32.totalorder %s32, 1
      %p95 = por %p93, %p94
      %p97 = scmp.ne.s32.totalorder %s80, %s96
      %p98 = scmp.eq.s32.totalorder %s32, 0
      %p99 = por %p97, %p98
      %s101 = sadd.s32 %s100, 1
      %p104 = scmp.eq.s32.totalorder %s26, 1
      %p105 = scmp.ne.s32.totalorder %s100, %s102
      %p106 = scmp.eq.s32.totalorder %s26, 0
      %p107 = por %p105, %p106
      %p108 = scmp.ne.s32.totalorder %s100, %s102
      %p109 = scmp.eq.s32.totalorder %s31, 1
      %p110 = por %p108, %p109
      %p111 = scmp.ne.s32.totalorder %s102, %s103
      %p112 = scmp.eq.s32.totalorder %s31, 0
      %p113 = por %p111, %p112
      %p114 = scmp.ne.s32.totalorder %s102, %s103
      %p115 = scmp.eq.s32.totalorder %s32, 1
      %p116 = por %p114, %p115
      %p118 = scmp.ne.s32.totalorder %s103, %s117
      %p119 = scmp.eq.s32.totalorder %s32, 0
      %p120 = por %p118, %p119
      %s122 = sadd.s32 %s121, 1
      %p125 = scmp.eq.s32.totalorder %s26, 1
      %p126 = scmp.ne.s32.totalorder %s121, %s123
      %p127 = scmp.eq.s32.totalorder %s26, 0
      %p128 = por %p126, %p127
      %p129 = scmp.ne.s32.totalorder %s121, %s123
      %p130 = scmp.eq.s32.totalorder %s31, 1
      %p131 = por %p129, %p130
      %p132 = scmp.ne.s32.totalorder %s123, %s124
      %p133 = scmp.eq.s32.totalorder %s31, 0
      %p134 = por %p132, %p133
      %p135 = scmp.ne.s32.totalorder %s123, %s124
      %p136 = scmp.eq.s32.totalorder %s32, 1
      %p137 = por %p135, %p136
      %p139 = scmp.ne.s32.totalorder %s124, %s138
      %p140 = scmp.eq.s32.totalorder %s32, 0
      %p141 = por %p139, %p140
      %s143 = sadd.s32 %s142, 1
      %p146 = scmp.eq.s32.totalorder %s26, 1
      %p147 = scmp.ne.s32.totalorder %s142, %s144
      %p148 = scmp.eq.s32.totalorder %s26, 0
      %p149 = por %p147, %p148
      %p150 = scmp.ne.s32.totalorder %s142, %s144
      %p151 = scmp.eq.s32.totalorder %s31, 1
      %p152 = por %p150, %p151
      %p153 = scmp.ne.s32.totalorder %s144, %s145
      %p154 = scmp.eq.s32.totalorder %s31, 0
      %p155 = por %p153, %p154
      %p156 = scmp.ne.s32.totalorder %s144, %s145
      %p157 = scmp.eq.s32.totalorder %s32, 1
      %p158 = por %p156, %p157
      %p160 = scmp.ne.s32.totalorder %s145, %s159
      %p161 = scmp.eq.s32.totalorder %s32, 0
      %p162 = por %p160, %p161
      %s164 = sadd.s32 %s163, 1
      %p167 = scmp.eq.s32.totalorder %s26, 1
      %p168 = scmp.ne.s32.totalorder %s163, %s165
      %p169 = scmp.eq.s32.totalorder %s26, 0
      %p170 = por %p168, %p169
      %p171 = scmp.ne.s32.totalorder %s163, %s165
      %p172 = scmp.eq.s32.totalorder %s31, 1
      %p173 = por %p171, %p172
      %p174 = scmp.ne.s32.totalorder %s165, %s166
      %p175 = scmp.eq.s32.totalorder %s31, 0
      %p176 = por %p174, %p175
      %p177 = scmp.ne.s32.totalorder %s165, %s166
      %p178 = scmp.eq.s32.totalorder %s32, 1
      %p179 = por %p177, %p178
      %p181 = scmp.ne.s32.totalorder %s166, %s180
      %p182 = scmp.eq.s32.totalorder %s32, 0
      %p183 = por %p181, %p182
      %s185 = sadd.s32 %s184, 1
      %p188 = scmp.eq.s32.totalorder %s26, 1
      %p189 = scmp.ne.s32.totalorder %s184, %s186
      %p190 = scmp.eq.s32.totalorder %s26, 0
      %p191 = por %p189, %p190
      %p192 = scmp.ne.s32.totalorder %s184, %s186
      %p193 = scmp.eq.s32.totalorder %s31, 1
      %p194 = por %p192, %p193
      %p195 = scmp.ne.s32.totalorder %s186, %s187
      %p196 = scmp.eq.s32.totalorder %s31, 0
      %p197 = por %p195, %p196
      %p198 = scmp.ne.s32.totalorder %s186, %s187
      %p199 = scmp.eq.s32.totalorder %s32, 1
      %p200 = por %p198, %p199
      %p202 = scmp.ne.s32.totalorder %s187, %s201
      %p203 = scmp.eq.s32.totalorder %s32, 0
      %p204 = por %p202, %p203
      %s206 = sadd.s32 %s205, 1
      %p209 = scmp.eq.s32.totalorder %s26, 1
      %p210 = scmp.ne.s32.totalorder %s205, %s207
      %p211 = scmp.eq.s32.totalorder %s26, 0
      %p212 = por %p210, %p211
      %p213 = scmp.ne.s32.totalorder %s205, %s207
      %p214 = scmp.eq.s32.totalorder %s31, 1
      %p215 = por %p213, %p214
      %p216 = scmp.ne.s32.totalorder %s207, %s208
      %p217 = scmp.eq.s32.totalorder %s31, 0
      %p218 = por %p216, %p217
      %p219 = scmp.ne.s32.totalorder %s207, %s208
      %p220 = scmp.eq.s32.totalorder %s32, 1
      %p221 = por %p219, %p220
      %p223 = scmp.ne.s32.totalorder %s208, %s222
      %p224 = scmp.eq.s32.totalorder %s32, 0
      %p225 = por %p223, %p224
      %s227 = sadd.s32 %s226, 1
      %p230 = scmp.eq.s32.totalorder %s26, 1
      %p231 = scmp.ne.s32.totalorder %s226, %s228
      %p232 = scmp.eq.s32.totalorder %s26, 0
      %p233 = por %p231, %p232
      %p234 = scmp.ne.s32.totalorder %s226, %s228
      %p235 = scmp.eq.s32.totalorder %s31, 1
      %p236 = por %p234, %p235
      %p237 = scmp.ne.s32.totalorder %s228, %s229
      %p238 = scmp.eq.s32.totalorder %s31, 0
      %p239 = por %p237, %p238
      %p240 = scmp.ne.s32.totalorder %s228, %s229
      %p241 = scmp.eq.s32.totalorder %s32, 1
      %p242 = por %p240, %p241
      %p244 = scmp.ne.s32.totalorder %s229, %s243
      %p245 = scmp.eq.s32.totalorder %s32, 0
      %p246 = por %p244, %p245
      %s248 = sadd.s32 %s247, 1
      %p251 = scmp.eq.s32.totalorder %s26, 1
      %p252 = scmp.ne.s32.totalorder %s247, %s249
      %p253 = scmp.eq.s32.totalorder %s26, 0
      %p254 = por %p252, %p253
      %p255 = scmp.ne.s32.totalorder %s247, %s249
      %p256 = scmp.eq.s32.totalorder %s31, 1
      %p257 = por %p255, %p256
      %p258 = scmp.ne.s32.totalorder %s249, %s250
      %p259 = scmp.eq.s32.totalorder %s31, 0
      %p260 = por %p258, %p259
      %p261 = scmp.ne.s32.totalorder %s249, %s250
      %p262 = scmp.eq.s32.totalorder %s32, 1
      %p263 = por %p261, %p262
      %p265 = scmp.ne.s32.totalorder %s250, %s264
      %p266 = scmp.eq.s32.totalorder %s32, 0
      %p267 = por %p265, %p266
      %s269 = sadd.s32 %s268, 1
      %p272 = scmp.eq.s32.totalorder %s26, 1
      %p273 = scmp.ne.s32.totalorder %s268, %s270
      %p274 = scmp.eq.s32.totalorder %s26, 0
      %p275 = por %p273, %p274
      %p276 = scmp.ne.s32.totalorder %s268, %s270
      %p277 = scmp.eq.s32.totalorder %s31, 1
      %p278 = por %p276, %p277
      %p279 = scmp.ne.s32.totalorder %s270, %s271
      %p280 = scmp.eq.s32.totalorder %s31, 0
      %p281 = por %p279, %p280
      %p282 = scmp.ne.s32.totalorder %s270, %s271
      %p283 = scmp.eq.s32.totalorder %s32, 1
      %p284 = por %p282, %p283
      %p286 = scmp.ne.s32.totalorder %s271, %s285
      %p287 = scmp.eq.s32.totalorder %s32, 0
      %p288 = por %p286, %p287
      %s289 = ssub.s32 %s33, %s45
      %s290 = ssub.s32 %s34, %s41
      %s291 = sor.u32 %s289, %s290
      %p292 = scmp.eq.s32.totalorder %s291, 0
      %s294 = sadd.s32 %s293, 1
      %s295 = scalar_select %p292, %s293, %s294
      %p298 = pneg %p292
      %p299 = scmp.eq.s32.totalorder %s26, 1
      %p300 = por %p298, %p299
      %p301 = scmp.ne.s32.totalorder %s293, %s296
      %p302 = scmp.eq.s32.totalorder %s26, 0
      %p303 = por %p301, %p302
      %p304 = scmp.ne.s32.totalorder %s293, %s296
      %p305 = scmp.eq.s32.totalorder %s31, 1
      %p306 = por %p304, %p305
      %p307 = scmp.ne.s32.totalorder %s296, %s297
      %p308 = scmp.eq.s32.totalorder %s31, 0
      %p309 = por %p307, %p308
      %p310 = scmp.ne.s32.totalorder %s296, %s297
      %p311 = scmp.eq.s32.totalorder %s32, 1
      %p312 = por %p310, %p311
      %p314 = scmp.ne.s32.totalorder %s297, %s313
      %p315 = scmp.eq.s32.totalorder %s32, 0
      %p316 = por %p314, %p315
      %p317 = scmp.le.s32.totalorder 1, %s26
      %p318 = scmp.lt.s32.totalorder %s26, 3
      %p319 = pnand %p317, %p318
      %p320 = pneg %p319
      // Predicated region
      $region9: #{intent_slot_attention_forward.1} parent=5 // pred_check
        _
      $region10: #{intent_slot_attention_forward.1} parent=5 // pred_check_branch
        %322 = sbr.rel (%p319) target = $region12
      $region11: #{intent_slot_attention_forward.1} parent=5 // pred_region
        %s323 = ssub.s32 %s26, 1
        // Predicated region
        $region13: #{intent_slot_attention_forward.1} parent=11 // pred_check
          %p324 = pneg %p113
        $region14: #{intent_slot_attention_forward.1} parent=11 // pred_check_branch
          %326 = sbr.rel (%p324) target = $region16
        $region15: #{intent_slot_attention_forward.1} parent=11 // pred_region
          _
        $region16: #{intent_slot_attention_forward.1} parent=11 // pred_fallthru
          _
        // Predicated region
        $region17: #{intent_slot_attention_forward.1} parent=11 // pred_check
          %p327 = pneg %p134
        $region18: #{intent_slot_attention_forward.1} parent=11 // pred_check_branch
          %329 = sbr.rel (%p327) target = $region20
        $region19: #{intent_slot_attention_forward.1} parent=11 // pred_region
          _
        $region20: #{intent_slot_attention_forward.1} parent=11 // pred_fallthru
          _
        // Predicated region
        $region21: #{intent_slot_attention_forward.1} parent=11 // pred_check
          %p330 = pneg %p155
        $region22: #{intent_slot_attention_forward.1} parent=11 // pred_check_branch
          %332 = sbr.rel (%p330) target = $region24
        $region23: #{intent_slot_attention_forward.1} parent=11 // pred_region
          _
        $region24: #{intent_slot_attention_forward.1} parent=11 // pred_fallthru
          _
        // Predicated region
        $region25: #{intent_slot_attention_forward.1} parent=11 // pred_check
          %p333 = pneg %p176
        $region26: #{intent_slot_attention_forward.1} parent=11 // pred_check_branch
          %335 = sbr.rel (%p333) target = $region28
        $region27: #{intent_slot_attention_forward.1} parent=11 // pred_region
          _
        $region28: #{intent_slot_attention_forward.1} parent=11 // pred_fallthru
          _
        // Predicated region
        $region29: #{intent_slot_attention_forward.1} parent=11 // pred_check
          %p336 = pneg %p197
        $region30: #{intent_slot_attention_forward.1} parent=11 // pred_check_branch
          %338 = sbr.rel (%p336) target = $region32
        $region31: #{intent_slot_attention_forward.1} parent=11 // pred_region
          %s340 = ssub.s32 512, 512
          %341 = vsyncadd [#allocation7], %s340
          %s342 = sshll.u32 [#allocation6], 4
          %s343 = int_to_ptr.vmem [resolvable:$true] %s342
          %348 = dma.hbm_to_vmem [thread:$0]  %s6, 512, %s343, [#allocation7], 128, 128, 8
        $region32: #{intent_slot_attention_forward.1} parent=11 // pred_fallthru
          _
        // Predicated region
        $region33: #{intent_slot_attention_forward.1} parent=11 // pred_check
          %p349 = pneg %p218
        $region34: #{intent_slot_attention_forward.1} parent=11 // pred_check_branch
          %351 = sbr.rel (%p349) target = $region36
        $region35: #{intent_slot_attention_forward.1} parent=11 // pred_region
          _
        $region36: #{intent_slot_attention_forward.1} parent=11 // pred_fallthru
          _
        // Predicated region
        $region37: #{intent_slot_attention_forward.1} parent=11 // pred_check
          %p352 = pneg %p239
        $region38: #{intent_slot_attention_forward.1} parent=11 // pred_check_branch
          %354 = sbr.rel (%p352) target = $region40
        $region39: #{intent_slot_attention_forward.1} parent=11 // pred_region
          _
        $region40: #{intent_slot_attention_forward.1} parent=11 // pred_fallthru
          _
        // Predicated region
        $region41: #{intent_slot_attention_forward.1} parent=11 // pred_check
          %p355 = pneg %p260
        $region42: #{intent_slot_attention_forward.1} parent=11 // pred_check_branch
          %357 = sbr.rel (%p355) target = $region44
        $region43: #{intent_slot_attention_forward.1} parent=11 // pred_region
          _
        $region44: #{intent_slot_attention_forward.1} parent=11 // pred_fallthru
          _
        // Predicated region
        $region45: #{intent_slot_attention_forward.1} parent=11 // pred_check
          %p358 = pneg %p281
        $region46: #{intent_slot_attention_forward.1} parent=11 // pred_check_branch
          %360 = sbr.rel (%p358) target = $region48
        $region47: #{intent_slot_attention_forward.1} parent=11 // pred_region
          _
        $region48: #{intent_slot_attention_forward.1} parent=11 // pred_fallthru
          _
      $region12: #{intent_slot_attention_forward.1} parent=5 // pred_fallthru
        _
      %p361 = scmp.lt.s32.totalorder %s26, 2
      // Predicated region
      $region49: #{intent_slot_attention_forward.1} parent=5 // pred_check
        %p362 = pneg %p361
      $region50: #{intent_slot_attention_forward.1} parent=5 // pred_check_branch
        %364 = sbr.rel (%p362) target = $region52
      $region51: #{intent_slot_attention_forward.1} parent=5 // pred_region
        // Predicated region
        $region53: #{intent_slot_attention_forward.1} parent=51 // pred_check
          %p365 = pneg %p60
        $region54: #{intent_slot_attention_forward.1} parent=51 // pred_check_branch
          %367 = sbr.rel (%p365) target = $region56
        $region55: #{intent_slot_attention_forward.1} parent=51 // pred_region
          %s368 = sand.u32 %s50, 1
          %s369 = scalar_lea.sflag [#allocation4], %s368
          %s370 = sand.u32 %s50, 1
          %s371 = smul.addr %s370, 8
          %s372 = scalar_lea.vmem [#allocation3], %s371
          %s374 = ssub.s32 128, 128
          %375 = vsyncadd %s369, %s374
          %s376 = sadd.s32 %s34, %s33
          %s377 = smul.addr %s376, 128
          %s378 = scalar_lea.hbm %s0, %s377
          %s380 = sshll.u32 %s372, 4
          %s381 = int_to_ptr.vmem [resolvable:$true] %s380
          %383 = dma.hbm_to_vmem [thread:$0]  %s378, 128, %s381, %s369
        $region56: #{intent_slot_attention_forward.1} parent=51 // pred_fallthru
          _
        // Predicated region
        $region57: #{intent_slot_attention_forward.1} parent=51 // pred_check
          %p384 = pneg %p86
        $region58: #{intent_slot_attention_forward.1} parent=51 // pred_check_branch
          %386 = sbr.rel (%p384) target = $region60
        $region59: #{intent_slot_attention_forward.1} parent=51 // pred_region
          %p387 = scmp.lt.s32.totalorder %s33, 1
          %s388 = scalar_select %p387, %s33, 1
          %s389 = smul.addr %s388, 4
          %s390 = scalar_lea.vmem %s1, %s389
        $region60: #{intent_slot_attention_forward.1} parent=51 // pred_fallthru
          _
      $region52: #{intent_slot_attention_forward.1} parent=5 // pred_fallthru
        _
      %p391 = scmp.le.s32.totalorder 1, %s26
      %p392 = scmp.lt.s32.totalorder %s26, 3
      %p393 = pnand %p391, %p392
      %p394 = pneg %p393
      // Predicated region
      $region61: #{intent_slot_attention_forward.1} parent=5 // pred_check
        _
      $region62: #{intent_slot_attention_forward.1} parent=5 // pred_check_branch
        %396 = sbr.rel (%p393) target = $region64
      $region63: #{intent_slot_attention_forward.1} parent=5 // pred_region
        %s397 = ssub.s32 %s26, 1
        %s398 = sand.u32 %s53, 1
        %s399 = scalar_lea.sflag [#allocation4], %s398
        %s400 = sand.u32 %s53, 1
        %s401 = smul.addr %s400, 8
        %s402 = scalar_lea.vmem [#allocation3], %s401
        // Predicated region
        $region65: #{intent_slot_attention_forward.1} parent=63 // pred_check
          %p403 = pneg %p66
        $region66: #{intent_slot_attention_forward.1} parent=63 // pred_check_branch
          %405 = sbr.rel (%p403) target = $region68
        $region67: #{intent_slot_attention_forward.1} parent=63 // pred_region
          %406 = dma.done %s399, 128
        $region68: #{intent_slot_attention_forward.1} parent=63 // pred_fallthru
          _
        // Predicated region
        $region69: #{intent_slot_attention_forward.1} parent=63 // pred_check
          %p407 = pneg %p197
        $region70: #{intent_slot_attention_forward.1} parent=63 // pred_check_branch
          %409 = sbr.rel (%p407) target = $region72
        $region71: #{intent_slot_attention_forward.1} parent=63 // pred_region
          %410 = dma.done [#allocation7], 512
        $region72: #{intent_slot_attention_forward.1} parent=63 // pred_fallthru
          _
        %s411 = sand.u32 %s53, 1
        %s412 = scalar_lea.sflag [#allocation4], %s411
        %s413 = sand.u32 %s53, 1
        %s414 = smul.addr %s413, 8
        %s415 = scalar_lea.vmem [#allocation3], %s414
        %p416 = pneg %p66
        %p417 = pneg %p63
        %p418 = scmp.lt.s32.totalorder %s35, 1
        %s419 = scalar_select %p418, %s35, 1
        %s420 = smul.addr %s419, 4
        %s421 = scalar_lea.vmem %s1, %s420
        %p422 = pneg %p92
        %p423 = pneg %p89
        %p424 = pneg %p113
        %p425 = pneg %p110
        %p426 = pneg %p134
        %p427 = pneg %p131
        %p428 = pneg %p155
        %p429 = pneg %p152
        %p430 = pneg %p176
        %p431 = pneg %p173
        %p432 = pneg %p197
        %p433 = pneg %p194
        %p434 = pneg %p218
        %p435 = pneg %p215
        %p436 = pneg %p239
        %p437 = pneg %p236
        %p438 = pneg %p260
        %p439 = pneg %p257
        %p440 = pneg %p281
        %p441 = pneg %p278
        %p442 = pneg %p309
        %p443 = pneg %p306
        %s444 = sand.u32 %s296, 1
        %s445 = scalar_lea.sflag [#allocation5], %s444
        %s446 = sand.u32 %s296, 1
        %s447 = smul.addr %s446, 8
        %s448 = scalar_lea.vmem [#allocation8], %s447
        %p449 = scmp.lt.s32.totalorder %s35, 1
        %s450 = scalar_select %p449, %s35, 1
        %s451 = smul.addr %s450, 4
        %s452 = scalar_lea.vmem %s1, %s451
        %v453 = vld [vmem:[%s402] sm:$0xff]
        %v454 = vld [vmem:[%s452] sm:$0xf]
        %v455 = vld [vmem:[%s2] sm:$0xff]
        %v456 = vld [vmem:[%s2 + $0x8] sm:$0xff]
        %v457 = vld [vmem:[%s2 + $0x10] sm:$0xff]
        %v458 = vld [vmem:[%s2 + $0x18] sm:$0xff]
        %v459 = vld [vmem:[%s3] sm:$0x1]
        %v461 = vlaneseq
        %v462 = vshrl.u32 %v461, 7
        %v463 = vsub.s32 0, %v462
        %v464 = vrot.slane %v459, %v463
        %vm466 = vcmask 261120
        %v468 = vsel %vm466, %v453, 0
        %470 = vmatprep.subr.mxu0 0.0
        %471 = vmatpush1.msra.mxu0 %v455
        %472 = vmatprep.subr.mxu0 0.0
        %473 = vmatpush1.msra.mxu0 %v456
        %474 = vmatprep.subr.mxu0 0.0
        %475 = vmatpush1.msra.mxu0 %v457
        %476 = vmatprep.subr.mxu0 0.0
        %477 = vmatpush1.msra.mxu0 %v458
        %478 = vmatprep.subr.mxu0 0.0
        %479 = vmatpush1.msra.mxu0 0.0
        %480 = vmatprep.subr.mxu0 0.0
        %481 = vmatpush1.msra.mxu0 0.0
        %482 = vmatprep.subr.mxu0 0.0
        %483 = vmatpush1.msra.mxu0 0.0
        %484 = vmatprep.subr.mxu0 0.0
        %485 = vmatpush1.msra.mxu0 0.0
        %486 = vmatprep.subr.mxu0 0.0
        %487 = vmatpush1.msra.mxu0 0.0
        %488 = vmatprep.subr.mxu0 0.0
        %489 = vmatpush1.msra.mxu0 0.0
        %490 = vmatprep.subr.mxu0 0.0
        %491 = vmatpush1.msra.mxu0 0.0
        %492 = vmatprep.subr.mxu0 0.0
        %493 = vmatpush1.msra.mxu0 0.0
        %494 = vmatprep.subr.mxu0 0.0
        %495 = vmatpush1.msra.mxu0 0.0
        %496 = vmatprep.subr.mxu0 0.0
        %497 = vmatpush1.msra.mxu0 0.0
        %498 = vmatprep.subr.mxu0 0.0
        %499 = vmatpush1.msra.mxu0 0.0
        %500 = vmatprep.subr.mxu0 0.0
        %501 = vmatpush1.msra.mxu0 0.0
        %502 = vmatprep.subr.mxu0 0.0
        %503 = vmatpush1.msra.mxu0 0.0
        %504 = vmatprep.subr.mxu0 0.0
        %505 = vmatpush1.msra.mxu0 0.0
        %506 = vmatprep.subr.mxu0 0.0
        %507 = vmatpush1.msra.mxu0 0.0
        %508 = vmatprep.subr.mxu0 0.0
        %509 = vmatpush1.msra.mxu0 0.0
        %510 = vmatprep.subr.mxu0 0.0
        %511 = vmatpush1.msra.mxu0 0.0
        %512 = vmatprep.subr.mxu0 0.0
        %513 = vmatpush1.msra.mxu0 0.0
        %514 = vmatprep.subr.mxu0 0.0
        %515 = vmatpush1.msra.mxu0 0.0
        %516 = vmatprep.subr.mxu0 0.0
        %517 = vmatpush1.msra.mxu0 0.0
        %518 = vmatprep.subr.mxu0 0.0
        %519 = vmatpush1.msra.mxu0 0.0
        %520 = vmatprep.subr.mxu0 0.0
        %521 = vmatpush1.msra.mxu0 0.0
        %522 = vmatprep.subr.mxu0 0.0
        %523 = vmatpush1.msra.mxu0 0.0
        %524 = vmatprep.subr.mxu0 0.0
        %525 = vmatpush1.msra.mxu0 0.0
        %526 = vmatprep.subr.mxu0 0.0
        %527 = vmatpush1.msra.mxu0 0.0
        %528 = vmatprep.subr.mxu0 0.0
        %529 = vmatpush1.msra.mxu0 0.0
        %530 = vmatprep.subr.mxu0 0.0
        %531 = vmatpush1.msra.mxu0 0.0
        %532 = vmatprep.subr.mxu0 0.0
        %533 = vmatpush1.msra.mxu0 0.0
        %534 = vmatprep.mubr.f32.mxu0 0.0
        %535 = vmatmul.mubr.f32.gmra.mrb[0].mxu0 %v468
        %v536 = vpop.f32.mrb[0].mxu0
        %v537 = vadd.f32 %v464, %v536
        %v538 = vpop.f32.mrb[0].mxu0
        %539 = vdwg.mxu0
        %v540 = vld [vmem:[%s4] sm:$0xff]
        %v541 = vld [vmem:[%s4 + $0x8] sm:$0xff]
        %v542 = vld [vmem:[%s4 + $0x10] sm:$0xff]
        %v543 = vld [vmem:[%s4 + $0x18] sm:$0xff]
        %v544 = vld [vmem:[%s5] sm:$0x1]
        %v546 = vlaneseq
        %v547 = vshrl.u32 %v546, 7
        %v548 = vsub.s32 0, %v547
        %v549 = vrot.slane %v544, %v548
        %v552 = vsel %vm466, %v454, 0
        %554 = vmatprep.subr.mxu0 0.0
        %555 = vmatpush1.msra.mxu0 %v540
        %556 = vmatprep.subr.mxu0 0.0
        %557 = vmatpush1.msra.mxu0 %v541
        %558 = vmatprep.subr.mxu0 0.0
        %559 = vmatpush1.msra.mxu0 %v542
        %560 = vmatprep.subr.mxu0 0.0
        %561 = vmatpush1.msra.mxu0 %v543
        %562 = vmatprep.subr.mxu0 0.0
        %563 = vmatpush1.msra.mxu0 0.0
        %564 = vmatprep.subr.mxu0 0.0
        %565 = vmatpush1.msra.mxu0 0.0
        %566 = vmatprep.subr.mxu0 0.0
        %567 = vmatpush1.msra.mxu0 0.0
        %568 = vmatprep.subr.mxu0 0.0
        %569 = vmatpush1.msra.mxu0 0.0
        %570 = vmatprep.subr.mxu0 0.0
        %571 = vmatpush1.msra.mxu0 0.0
        %572 = vmatprep.subr.mxu0 0.0
        %573 = vmatpush1.msra.mxu0 0.0
        %574 = vmatprep.subr.mxu0 0.0
        %575 = vmatpush1.msra.mxu0 0.0
        %576 = vmatprep.subr.mxu0 0.0
        %577 = vmatpush1.msra.mxu0 0.0
        %578 = vmatprep.subr.mxu0 0.0
        %579 = vmatpush1.msra.mxu0 0.0
        %580 = vmatprep.subr.mxu0 0.0
        %581 = vmatpush1.msra.mxu0 0.0
        %582 = vmatprep.subr.mxu0 0.0
        %583 = vmatpush1.msra.mxu0 0.0
        %584 = vmatprep.subr.mxu0 0.0
        %585 = vmatpush1.msra.mxu0 0.0
        %586 = vmatprep.subr.mxu0 0.0
        %587 = vmatpush1.msra.mxu0 0.0
        %588 = vmatprep.subr.mxu0 0.0
        %589 = vmatpush1.msra.mxu0 0.0
        %590 = vmatprep.subr.mxu0 0.0
        %591 = vmatpush1.msra.mxu0 0.0
        %592 = vmatprep.subr.mxu0 0.0
        %593 = vmatpush1.msra.mxu0 0.0
        %594 = vmatprep.subr.mxu0 0.0
        %595 = vmatpush1.msra.mxu0 0.0
        %596 = vmatprep.subr.mxu0 0.0
        %597 = vmatpush1.msra.mxu0 0.0
        %598 = vmatprep.subr.mxu0 0.0
        %599 = vmatpush1.msra.mxu0 0.0
        %600 = vmatprep.subr.mxu0 0.0
        %601 = vmatpush1.msra.mxu0 0.0
        %602 = vmatprep.subr.mxu0 0.0
        %603 = vmatpush1.msra.mxu0 0.0
        %604 = vmatprep.subr.mxu0 0.0
        %605 = vmatpush1.msra.mxu0 0.0
        %606 = vmatprep.subr.mxu0 0.0
        %607 = vmatpush1.msra.mxu0 0.0
        %608 = vmatprep.subr.mxu0 0.0
        %609 = vmatpush1.msra.mxu0 0.0
        %610 = vmatprep.subr.mxu0 0.0
        %611 = vmatpush1.msra.mxu0 0.0
        %612 = vmatprep.subr.mxu0 0.0
        %613 = vmatpush1.msra.mxu0 0.0
        %614 = vmatprep.subr.mxu0 0.0
        %615 = vmatpush1.msra.mxu0 0.0
        %616 = vmatprep.subr.mxu0 0.0
        %617 = vmatpush1.msra.mxu0 0.0
        %618 = vmatprep.mubr.f32.mxu0 0.0
        %619 = vmatmul.mubr.f32.gmra.mrb[0].mxu0 %v552
        %v620 = vpop.f32.mrb[0].mxu0
        %v621 = vadd.f32 %v549, %v620
        %v622 = vpop.f32.mrb[0].mxu0
        %623 = vdwg.mxu0
        %v624 = vld [vmem:[#allocation6] sm:$0xff]
        %v625 = vld [vmem:[#allocation6 + $0x8] sm:$0xff]
        %v626 = vld [vmem:[#allocation6 + $0x10] sm:$0xff]
        %v627 = vld [vmem:[#allocation6 + $0x18] sm:$0xff]
        %v628 = vld [vmem:[%s7] sm:$0x1]
        %v630 = vlaneseq
        %v631 = vshrl.u32 %v630, 7
        %v632 = vsub.s32 0, %v631
        %v633 = vrot.slane %v628, %v632
        %635 = vmatprep.subr.mxu0 0.0
        %636 = vmatpush1.msra.mxu0 %v624
        %637 = vmatprep.subr.mxu0 0.0
        %638 = vmatpush1.msra.mxu0 %v625
        %639 = vmatprep.subr.mxu0 0.0
        %640 = vmatpush1.msra.mxu0 %v626
        %641 = vmatprep.subr.mxu0 0.0
        %642 = vmatpush1.msra.mxu0 %v627
        %643 = vmatprep.subr.mxu0 0.0
        %644 = vmatpush1.msra.mxu0 0.0
        %645 = vmatprep.subr.mxu0 0.0
        %646 = vmatpush1.msra.mxu0 0.0
        %647 = vmatprep.subr.mxu0 0.0
        %648 = vmatpush1.msra.mxu0 0.0
        %649 = vmatprep.subr.mxu0 0.0
        %650 = vmatpush1.msra.mxu0 0.0
        %651 = vmatprep.subr.mxu0 0.0
        %652 = vmatpush1.msra.mxu0 0.0
        %653 = vmatprep.subr.mxu0 0.0
        %654 = vmatpush1.msra.mxu0 0.0
        %655 = vmatprep.subr.mxu0 0.0
        %656 = vmatpush1.msra.mxu0 0.0
        %657 = vmatprep.subr.mxu0 0.0
        %658 = vmatpush1.msra.mxu0 0.0
        %659 = vmatprep.subr.mxu0 0.0
        %660 = vmatpush1.msra.mxu0 0.0
        %661 = vmatprep.subr.mxu0 0.0
        %662 = vmatpush1.msra.mxu0 0.0
        %663 = vmatprep.subr.mxu0 0.0
        %664 = vmatpush1.msra.mxu0 0.0
        %665 = vmatprep.subr.mxu0 0.0
        %666 = vmatpush1.msra.mxu0 0.0
        %667 = vmatprep.subr.mxu0 0.0
        %668 = vmatpush1.msra.mxu0 0.0
        %669 = vmatprep.subr.mxu0 0.0
        %670 = vmatpush1.msra.mxu0 0.0
        %671 = vmatprep.subr.mxu0 0.0
        %672 = vmatpush1.msra.mxu0 0.0
        %673 = vmatprep.subr.mxu0 0.0
        %674 = vmatpush1.msra.mxu0 0.0
        %675 = vmatprep.subr.mxu0 0.0
        %676 = vmatpush1.msra.mxu0 0.0
        %677 = vmatprep.subr.mxu0 0.0
        %678 = vmatpush1.msra.mxu0 0.0
        %679 = vmatprep.subr.mxu0 0.0
        %680 = vmatpush1.msra.mxu0 0.0
        %681 = vmatprep.subr.mxu0 0.0
        %682 = vmatpush1.msra.mxu0 0.0
        %683 = vmatprep.subr.mxu0 0.0
        %684 = vmatpush1.msra.mxu0 0.0
        %685 = vmatprep.subr.mxu0 0.0
        %686 = vmatpush1.msra.mxu0 0.0
        %687 = vmatprep.subr.mxu0 0.0
        %688 = vmatpush1.msra.mxu0 0.0
        %689 = vmatprep.subr.mxu0 0.0
        %690 = vmatpush1.msra.mxu0 0.0
        %691 = vmatprep.subr.mxu0 0.0
        %692 = vmatpush1.msra.mxu0 0.0
        %693 = vmatprep.subr.mxu0 0.0
        %694 = vmatpush1.msra.mxu0 0.0
        %695 = vmatprep.subr.mxu0 0.0
        %696 = vmatpush1.msra.mxu0 0.0
        %697 = vmatprep.subr.mxu0 0.0
        %698 = vmatpush1.msra.mxu0 0.0
        %699 = vmatprep.mubr.f32.mxu0 0.0
        %700 = vmatmul.mubr.f32.gmra.mrb[0].mxu0 %v552
        %v701 = vpop.f32.mrb[0].mxu0
        %v702 = vadd.f32 %v633, %v701
        %v703 = vpop.f32.mrb[0].mxu0
        %704 = vdwg.mxu0
        %v706 = vsel %vm466, %v537, 0
        %v709 = vsel %vm466, %v621, 0
        %711 = vmatprep.subr.mxu0 0.0
        %712 = vmatpush1.xpose.msra.mxu0 %v709
        %713 = vmatprep.subr.mxu0 0.0
        %714 = vmatpush1.xpose.msra.mxu0 0.0
        %715 = vmatprep.subr.mxu0 0.0
        %716 = vmatpush1.xpose.msra.mxu0 0.0
        %717 = vmatprep.subr.mxu0 0.0
        %718 = vmatpush1.xpose.msra.mxu0 0.0
        %719 = vmatprep.subr.mxu0 0.0
        %720 = vmatpush1.xpose.msra.mxu0 0.0
        %721 = vmatprep.subr.mxu0 0.0
        %722 = vmatpush1.xpose.msra.mxu0 0.0
        %723 = vmatprep.subr.mxu0 0.0
        %724 = vmatpush1.xpose.msra.mxu0 0.0
        %725 = vmatprep.subr.mxu0 0.0
        %726 = vmatpush1.xpose.msra.mxu0 0.0
        %727 = vmatprep.subr.mxu0 0.0
        %728 = vmatpush1.xpose.msra.mxu0 0.0
        %729 = vmatprep.subr.mxu0 0.0
        %730 = vmatpush1.xpose.msra.mxu0 0.0
        %731 = vmatprep.subr.mxu0 0.0
        %732 = vmatpush1.xpose.msra.mxu0 0.0
        %733 = vmatprep.subr.mxu0 0.0
        %734 = vmatpush1.xpose.msra.mxu0 0.0
        %735 = vmatprep.subr.mxu0 0.0
        %736 = vmatpush1.xpose.msra.mxu0 0.0
        %737 = vmatprep.subr.mxu0 0.0
        %738 = vmatpush1.xpose.msra.mxu0 0.0
        %739 = vmatprep.subr.mxu0 0.0
        %740 = vmatpush1.xpose.msra.mxu0 0.0
        %741 = vmatprep.subr.mxu0 0.0
        %742 = vmatpush1.xpose.msra.mxu0 0.0
        %743 = vmatprep.subr.mxu0 0.0
        %744 = vmatpush1.xpose.msra.mxu0 0.0
        %745 = vmatprep.subr.mxu0 0.0
        %746 = vmatpush1.xpose.msra.mxu0 0.0
        %747 = vmatprep.subr.mxu0 0.0
        %748 = vmatpush1.xpose.msra.mxu0 0.0
        %749 = vmatprep.subr.mxu0 0.0
        %750 = vmatpush1.xpose.msra.mxu0 0.0
        %751 = vmatprep.subr.mxu0 0.0
        %752 = vmatpush1.xpose.msra.mxu0 0.0
        %753 = vmatprep.subr.mxu0 0.0
        %754 = vmatpush1.xpose.msra.mxu0 0.0
        %755 = vmatprep.subr.mxu0 0.0
        %756 = vmatpush1.xpose.msra.mxu0 0.0
        %757 = vmatprep.subr.mxu0 0.0
        %758 = vmatpush1.xpose.msra.mxu0 0.0
        %759 = vmatprep.subr.mxu0 0.0
        %760 = vmatpush1.xpose.msra.mxu0 0.0
        %761 = vmatprep.subr.mxu0 0.0
        %762 = vmatpush1.xpose.msra.mxu0 0.0
        %763 = vmatprep.subr.mxu0 0.0
        %764 = vmatpush1.xpose.msra.mxu0 0.0
        %765 = vmatprep.subr.mxu0 0.0
        %766 = vmatpush1.xpose.msra.mxu0 0.0
        %767 = vmatprep.subr.mxu0 0.0
        %768 = vmatpush1.xpose.msra.mxu0 0.0
        %769 = vmatprep.subr.mxu0 0.0
        %770 = vmatpush1.xpose.msra.mxu0 0.0
        %771 = vmatprep.subr.mxu0 0.0
        %772 = vmatpush1.xpose.msra.mxu0 0.0
        %773 = vmatprep.subr.mxu0 0.0
        %774 = vmatpush1.xpose.msra.mxu0 0.0
        %775 = vmatprep.mubr.f32.mxu0 0.0
        %776 = vmatmul.mubr.f32.gmra.mrb[0].mxu0 %v706
        %v777 = vpop.f32.mrb[0].mxu0
        %v778 = vadd.f32 0.0, %v777
        %v779 = vpop.f32.mrb[0].mxu0
        %780 = vdwg.mxu0
        %vm781 = vcmask 31744
        %v782 = vsel %vm781, %v778, -inf
        %783 = vmax.xlane.f32.xlu0 %v782
        %v784 = vpop.xlane.xlu0 %783
        %v785 = vsub.f32 %v778, %v784
        %v786 = vmul.f32 %v785, 1.442695
        %v787 = vpow.pop %v786
        %v788 = vsel %vm781, %v787, 0.0
        %789 = vadd.xlane.f32.xlu0 %v788
        %v790 = vpop.xlane.xlu0 %789
        %v791 = vrcp.pop %v790
        %v792 = vmul.f32 %v791, 0.17677669
        %v793 = vmul.f32 %v787, %v792
        %v795 = vsel %vm781, %v793, 0
        %vm797 = vcmask 1043456
        %v799 = vsel %vm797, %v702, 0
        %801 = vmatprep.subr.mxu0 0.0
        %802 = vmatpush1.msra.mxu0 %v799
        %803 = vmatprep.subr.mxu0 0.0
        %804 = vmatpush1.msra.mxu0 0.0
        %805 = vmatprep.subr.mxu0 0.0
        %806 = vmatpush1.msra.mxu0 0.0
        %807 = vmatprep.subr.mxu0 0.0
        %808 = vmatpush1.msra.mxu0 0.0
        %809 = vmatprep.subr.mxu0 0.0
        %810 = vmatpush1.msra.mxu0 0.0
        %811 = vmatprep.subr.mxu0 0.0
        %812 = vmatpush1.msra.mxu0 0.0
        %813 = vmatprep.subr.mxu0 0.0
        %814 = vmatpush1.msra.mxu0 0.0
        %815 = vmatprep.subr.mxu0 0.0
        %816 = vmatpush1.msra.mxu0 0.0
        %817 = vmatprep.subr.mxu0 0.0
        %818 = vmatpush1.msra.mxu0 0.0
        %819 = vmatprep.subr.mxu0 0.0
        %820 = vmatpush1.msra.mxu0 0.0
        %821 = vmatprep.subr.mxu0 0.0
        %822 = vmatpush1.msra.mxu0 0.0
        %823 = vmatprep.subr.mxu0 0.0
        %824 = vmatpush1.msra.mxu0 0.0
        %825 = vmatprep.subr.mxu0 0.0
        %826 = vmatpush1.msra.mxu0 0.0
        %827 = vmatprep.subr.mxu0 0.0
        %828 = vmatpush1.msra.mxu0 0.0
        %829 = vmatprep.subr.mxu0 0.0
        %830 = vmatpush1.msra.mxu0 0.0
        %831 = vmatprep.subr.mxu0 0.0
        %832 = vmatpush1.msra.mxu0 0.0
        %833 = vmatprep.subr.mxu0 0.0
        %834 = vmatpush1.msra.mxu0 0.0
        %835 = vmatprep.subr.mxu0 0.0
        %836 = vmatpush1.msra.mxu0 0.0
        %837 = vmatprep.subr.mxu0 0.0
        %838 = vmatpush1.msra.mxu0 0.0
        %839 = vmatprep.subr.mxu0 0.0
        %840 = vmatpush1.msra.mxu0 0.0
        %841 = vmatprep.subr.mxu0 0.0
        %842 = vmatpush1.msra.mxu0 0.0
        %843 = vmatprep.subr.mxu0 0.0
        %844 = vmatpush1.msra.mxu0 0.0
        %845 = vmatprep.subr.mxu0 0.0
        %846 = vmatpush1.msra.mxu0 0.0
        %847 = vmatprep.subr.mxu0 0.0
        %848 = vmatpush1.msra.mxu0 0.0
        %849 = vmatprep.subr.mxu0 0.0
        %850 = vmatpush1.msra.mxu0 0.0
        %851 = vmatprep.subr.mxu0 0.0
        %852 = vmatpush1.msra.mxu0 0.0
        %853 = vmatprep.subr.mxu0 0.0
        %854 = vmatpush1.msra.mxu0 0.0
        %855 = vmatprep.subr.mxu0 0.0
        %856 = vmatpush1.msra.mxu0 0.0
        %857 = vmatprep.subr.mxu0 0.0
        %858 = vmatpush1.msra.mxu0 0.0
        %859 = vmatprep.subr.mxu0 0.0
        %860 = vmatpush1.msra.mxu0 0.0
        %861 = vmatprep.subr.mxu0 0.0
        %862 = vmatpush1.msra.mxu0 0.0
        %863 = vmatprep.subr.mxu0 0.0
        %864 = vmatpush1.msra.mxu0 0.0
        %865 = vmatprep.mubr.f32.mxu0 0.0
        %866 = vmatmul.mubr.f32.gmra.mrb[0].mxu0 %v795
        %v867 = vpop.f32.mrb[0].mxu0
        %v868 = vadd.f32 %v453, %v867
        %v869 = vpop.f32.mrb[0].mxu0
        %870 = vdwg.mxu0
        %v871 = vld [vmem:[%s8] sm:$0xff]
        %v872 = vld [vmem:[%s8 + $0x8] sm:$0xff]
        %v873 = vld [vmem:[%s8 + $0x10] sm:$0xff]
        %v874 = vld [vmem:[%s8 + $0x18] sm:$0xff]
        %v875 = vld [vmem:[%s9] sm:$0xff]
        %v876 = vld [vmem:[%s9 + $0x8] sm:$0xff]
        %v877 = vld [vmem:[%s9 + $0x10] sm:$0xff]
        %v878 = vld [vmem:[%s9 + $0x18] sm:$0xff]
        %879 = vmatprep.subr.mxu0 0.0
        %880 = vmatpush1.msra.mxu0 %v875
        %881 = vmatprep.subr.mxu0 0.0
        %882 = vmatpush1.msra.mxu0 %v876
        %883 = vmatprep.subr.mxu0 0.0
        %884 = vmatpush1.msra.mxu0 %v877
        %885 = vmatprep.subr.mxu0 0.0
        %886 = vmatpush1.msra.mxu0 %v878
        %887 = vmatprep.subr.mxu0 0.0
        %888 = vmatpush1.msra.mxu0 0.0
        %889 = vmatprep.subr.mxu0 0.0
        %890 = vmatpush1.msra.mxu0 0.0
        %891 = vmatprep.subr.mxu0 0.0
        %892 = vmatpush1.msra.mxu0 0.0
        %893 = vmatprep.subr.mxu0 0.0
        %894 = vmatpush1.msra.mxu0 0.0
        %895 = vmatprep.subr.mxu0 0.0
        %896 = vmatpush1.msra.mxu0 0.0
        %897 = vmatprep.subr.mxu0 0.0
        %898 = vmatpush1.msra.mxu0 0.0
        %899 = vmatprep.subr.mxu0 0.0
        %900 = vmatpush1.msra.mxu0 0.0
        %901 = vmatprep.subr.mxu0 0.0
        %902 = vmatpush1.msra.mxu0 0.0
        %903 = vmatprep.subr.mxu0 0.0
        %904 = vmatpush1.msra.mxu0 0.0
        %905 = vmatprep.subr.mxu0 0.0
        %906 = vmatpush1.msra.mxu0 0.0
        %907 = vmatprep.subr.mxu0 0.0
        %908 = vmatpush1.msra.mxu0 0.0
        %909 = vmatprep.subr.mxu0 0.0
        %910 = vmatpush1.msra.mxu0 0.0
        %911 = vmatprep.subr.mxu0 0.0
        %912 = vmatpush1.msra.mxu0 0.0
        %913 = vmatprep.subr.mxu0 0.0
        %914 = vmatpush1.msra.mxu0 0.0
        %915 = vmatprep.subr.mxu0 0.0
        %916 = vmatpush1.msra.mxu0 0.0
        %917 = vmatprep.subr.mxu0 0.0
        %918 = vmatpush1.msra.mxu0 0.0
        %919 = vmatprep.subr.mxu0 0.0
        %920 = vmatpush1.msra.mxu0 0.0
        %921 = vmatprep.subr.mxu0 0.0
        %922 = vmatpush1.msra.mxu0 0.0
        %923 = vmatprep.subr.mxu0 0.0
        %924 = vmatpush1.msra.mxu0 0.0
        %925 = vmatprep.subr.mxu0 0.0
        %926 = vmatpush1.msra.mxu0 0.0
        %927 = vmatprep.subr.mxu0 0.0
        %928 = vmatpush1.msra.mxu0 0.0
        %929 = vmatprep.subr.mxu0 0.0
        %930 = vmatpush1.msra.mxu0 0.0
        %931 = vmatprep.subr.mxu0 0.0
        %932 = vmatpush1.msra.mxu0 0.0
        %933 = vmatprep.subr.mxu0 0.0
        %934 = vmatpush1.msra.mxu0 0.0
        %935 = vmatprep.subr.mxu0 0.0
        %936 = vmatpush1.msra.mxu0 0.0
        %937 = vmatprep.subr.mxu0 0.0
        %938 = vmatpush1.msra.mxu0 0.0
        %939 = vmatprep.subr.mxu0 0.0
        %940 = vmatpush1.msra.mxu0 0.0
        %941 = vmatprep.subr.mxu0 0.0
        %942 = vmatpush1.msra.mxu0 0.0
        %943 = vmatprep.mubr.f32.mxu0 0.0
        %944 = vmatmul.mubr.f32.gmra.mrb[0].mxu0 %v468
        %v945 = vpop.f32.mrb[0].mxu0
        %v946 = vadd.f32 0.0, %v945
        %v947 = vpop.f32.mrb[0].mxu0
        %948 = vdwg.mxu0
        %v950 = vsel %vm466, %v868, 0
        %952 = vmatprep.subr.mxu0 0.0
        %953 = vmatpush1.msra.mxu0 %v871
        %954 = vmatprep.subr.mxu0 0.0
        %955 = vmatpush1.msra.mxu0 %v872
        %956 = vmatprep.subr.mxu0 0.0
        %957 = vmatpush1.msra.mxu0 %v873
        %958 = vmatprep.subr.mxu0 0.0
        %959 = vmatpush1.msra.mxu0 %v874
        %960 = vmatprep.subr.mxu0 0.0
        %961 = vmatpush1.msra.mxu0 0.0
        %962 = vmatprep.subr.mxu0 0.0
        %963 = vmatpush1.msra.mxu0 0.0
        %964 = vmatprep.subr.mxu0 0.0
        %965 = vmatpush1.msra.mxu0 0.0
        %966 = vmatprep.subr.mxu0 0.0
        %967 = vmatpush1.msra.mxu0 0.0
        %968 = vmatprep.subr.mxu0 0.0
        %969 = vmatpush1.msra.mxu0 0.0
        %970 = vmatprep.subr.mxu0 0.0
        %971 = vmatpush1.msra.mxu0 0.0
        %972 = vmatprep.subr.mxu0 0.0
        %973 = vmatpush1.msra.mxu0 0.0
        %974 = vmatprep.subr.mxu0 0.0
        %975 = vmatpush1.msra.mxu0 0.0
        %976 = vmatprep.subr.mxu0 0.0
        %977 = vmatpush1.msra.mxu0 0.0
        %978 = vmatprep.subr.mxu0 0.0
        %979 = vmatpush1.msra.mxu0 0.0
        %980 = vmatprep.subr.mxu0 0.0
        %981 = vmatpush1.msra.mxu0 0.0
        %982 = vmatprep.subr.mxu0 0.0
        %983 = vmatpush1.msra.mxu0 0.0
        %984 = vmatprep.subr.mxu0 0.0
        %985 = vmatpush1.msra.mxu0 0.0
        %986 = vmatprep.subr.mxu0 0.0
        %987 = vmatpush1.msra.mxu0 0.0
        %988 = vmatprep.subr.mxu0 0.0
        %989 = vmatpush1.msra.mxu0 0.0
        %990 = vmatprep.subr.mxu0 0.0
        %991 = vmatpush1.msra.mxu0 0.0
        %992 = vmatprep.subr.mxu0 0.0
        %993 = vmatpush1.msra.mxu0 0.0
        %994 = vmatprep.subr.mxu0 0.0
        %995 = vmatpush1.msra.mxu0 0.0
        %996 = vmatprep.subr.mxu0 0.0
        %997 = vmatpush1.msra.mxu0 0.0
        %998 = vmatprep.subr.mxu0 0.0
        %999 = vmatpush1.msra.mxu0 0.0
        %1000 = vmatprep.subr.mxu0 0.0
        %1001 = vmatpush1.msra.mxu0 0.0
        %1002 = vmatprep.subr.mxu0 0.0
        %1003 = vmatpush1.msra.mxu0 0.0
        %1004 = vmatprep.subr.mxu0 0.0
        %1005 = vmatpush1.msra.mxu0 0.0
        %1006 = vmatprep.subr.mxu0 0.0
        %1007 = vmatpush1.msra.mxu0 0.0
        %1008 = vmatprep.subr.mxu0 0.0
        %1009 = vmatpush1.msra.mxu0 0.0
        %1010 = vmatprep.subr.mxu0 0.0
        %1011 = vmatpush1.msra.mxu0 0.0
        %1012 = vmatprep.subr.mxu0 0.0
        %1013 = vmatpush1.msra.mxu0 0.0
        %1014 = vmatprep.subr.mxu0 0.0
        %1015 = vmatpush1.msra.mxu0 0.0
        %1016 = vmatprep.mubr.f32.mxu0 0.0
        %1017 = vmatmul.mubr.f32.gmra.mrb[0].mxu0 %v950
        %v1018 = vpop.f32.mrb[0].mxu0
        %v1019 = vadd.f32 %v946, %v1018
        %v1020 = vpop.f32.mrb[0].mxu0
        %1021 = vdwg.mxu0
        %v1022 = vld [vmem:[#allocation2] sm:$0x1]
        %v1024 = vlaneseq
        %v1025 = vshrl.u32 %v1024, 7
        %v1026 = vsub.s32 0, %v1025
        %v1027 = vrot.slane %v1022, %v1026
        %v1029 = vadd.f32 %v1019, %v1027
        %v1030 = vsub.f32 0.0, %v1029
        %v1031 = vmul.f32 %v1030, 1.442695
        %v1032 = vpow.pop %v1031
        %v1033 = vadd.f32 %v1032, 1.0
        %v1034 = vrcp.pop %v1033
        %1036 = vset.pattern.permute.xlu0 0
        %1037 = vperm.xlu0 %1036, %v1034
        %v1038 = vpop.permute.xlu0 %1037
        %v1040 = vmul.f32 %v1038, %v868
        %v1041 = vsub.f32 1.0, %v1034
        %1043 = vset.pattern.permute.xlu0 0
        %1044 = vperm.xlu0 %1043, %v1041
        %v1045 = vpop.permute.xlu0 %1044
        %v1047 = vmul.f32 %v1045, %v453
        %v1048 = vadd.f32 %v1040, %v1047
        %1049 = vst.msk [vmem:[%s448] sm:$0xff] %vm466, %v1048
        %s1050 = sand.u32 %s296, 1
        %s1051 = scalar_lea.sflag [#allocation5], %s1050
        %s1052 = sand.u32 %s296, 1
        %s1053 = smul.addr %s1052, 8
        %s1054 = scalar_lea.vmem [#allocation8], %s1053
        // Predicated region
        $region73: #{intent_slot_attention_forward.1} parent=63 // pred_check
          %p1055 = pneg %p306
        $region74: #{intent_slot_attention_forward.1} parent=63 // pred_check_branch
          %1057 = sbr.rel (%p1055) target = $region76
        $region75: #{intent_slot_attention_forward.1} parent=63 // pred_region
          %s1059 = ssub.s32 128, 128
          %1060 = vsyncadd %s1051, %s1059
          %s1061 = sadd.s32 %s36, %s35
          %s1062 = smul.addr %s1061, 128
          %s1063 = scalar_lea.hbm %s11, %s1062
          %s1065 = sshll.u32 %s1054, 4
          %s1066 = int_to_ptr.vmem [resolvable:$true] %s1065
          %1068 = dma.vmem_to_hbm [thread:$0]  %s1066, 128, %s1063, %s1051
        $region76: #{intent_slot_attention_forward.1} parent=63 // pred_fallthru
          _
      $region64: #{intent_slot_attention_forward.1} parent=5 // pred_fallthru
        _
      %p1069 = scmp.le.s32.totalorder 2, %s26
      // Predicated region
      $region77: #{intent_slot_attention_forward.1} parent=5 // pred_check
        %p1070 = pneg %p1069
      $region78: #{intent_slot_attention_forward.1} parent=5 // pred_check_branch
        %1072 = sbr.rel (%p1070) target = $region80
      $region79: #{intent_slot_attention_forward.1} parent=5 // pred_region
        %s1073 = ssub.s32 %s26, 2
        // Predicated region
        $region81: #{intent_slot_attention_forward.1} parent=79 // pred_check
          %p1074 = pneg %p312
        $region82: #{intent_slot_attention_forward.1} parent=79 // pred_check_branch
          %1076 = sbr.rel (%p1074) target = $region84
        $region83: #{intent_slot_attention_forward.1} parent=79 // pred_region
          %s1077 = sand.u32 %s297, 1
          %s1078 = scalar_lea.sflag [#allocation5], %s1077
          %s1079 = sand.u32 %s297, 1
          %s1080 = smul.addr %s1079, 8
          %s1081 = scalar_lea.vmem [#allocation8], %s1080
          %1082 = dma.done %s1078, 128
        $region84: #{intent_slot_attention_forward.1} parent=79 // pred_fallthru
          _
      $region80: #{intent_slot_attention_forward.1} parent=5 // pred_fallthru
        _
    $region6: #{intent_slot_attention_forward.1} parent=1 // loop_footer
      %s30 = sadd.s32 1, %s26
    $region7: #{intent_slot_attention_forward.1} parent=1 // loop_footer_branch
      %25 = sbr.rel target = $region3
    $region8: #{intent_slot_attention_forward.1} parent=1 // loop_exit
      _
    %1083 = vsyncpa [#allocation4], 1
    %s1084 = scalar_lea.sflag [#allocation4], 1
    %1085 = vsyncpa %s1084, 1
    %1086 = vsyncpa [#allocation7], 1
    %1087 = vsyncpa [#allocation5], 1
    %s1088 = scalar_lea.sflag [#allocation5], 1
    %1089 = vsyncpa %s1088, 1

</llo_original>
